<compile_context>
chip_gen: v7x
topology: tpu7x:2x2x1
jax: 0.10.0
libtpu: 0.0.40
codegen_flags: <defaults>
</compile_context>

<pallas_src>
import jax
import jax.numpy as jnp
from jax.experimental import pallas as pl
from jax.experimental.pallas import tpu as pltpu

# ---- problem sizes (small, consistent with the module) ----
B = 2                    # batch
S = 8                    # sequence length (x.size(1))
D_MODEL = 32             # d_model
K = 10                   # number of Gaussian components
STRIDE = 50              # hard-coded stride in the module's forward
TOTAL_SIZE = S * STRIDE  # total_size; forward slices pos_enc[: S*50 : 50]


def gaussian_position_kernel(x_ref, params_ref, emb_ref, o_ref):
    """x: (B,S,D).  params: (2,K) rows = [mu; sigma].  emb: (K,D).  o: (B,S,D)."""
    s = x_ref.shape[1]
    k = emb_ref.shape[0]

    mu = params_ref[0:1, :]                      # (1, K)
    sigma = params_ref[1:2, :]                   # (1, K)

    # Position values 0, 50, ..., (S-1)*50 generated in-kernel (no DMA'd input).
    pos = (jax.lax.broadcasted_iota(jnp.int32, (s, k), 0)
           .astype(jnp.float32) * float(STRIDE))                 # (S, K)

    # normal_pdf: log_p = -(pos-mu)^2 / (2*sigma^2) - log(sigma), softmax over K.
    a = pos - mu                                                  # (S, K)
    inv_2s2 = pl.reciprocal(2.0 * sigma * sigma, approx=False)    # (1, K)
    log_p = -(a * a) * inv_2s2 - jnp.log(sigma)                   # (S, K)

    m = jnp.max(log_p, axis=-1, keepdims=True)
    e = jnp.exp(log_p - m)
    denom = jnp.sum(e, axis=-1, keepdims=True)
    weights = e * pl.reciprocal(denom, approx=True)               # (S, K)

    pos_enc = jnp.dot(weights, emb_ref[...],
                      preferred_element_type=jnp.float32)         # (S, D)

    # Broadcast add over batch, stored in-place (output aliases x).
    o_ref[...] = x_ref[...] + pos_enc[None, :, :]


def gaussian_position_forward(x, embedding, params):
    """x: (B,S,D) f32.  embedding: (K,D) f32.  params: (2,K) f32 = [mu; sigma]."""
    b, s, d = x.shape
    # module semantics require the strided rows 0, 50, ..., (s-1)*50 to exist
    assert (s - 1) * STRIDE < TOTAL_SIZE

    vmem = pltpu.MemorySpace.VMEM
    return pl.pallas_call(
        gaussian_position_kernel,
        out_shape=jax.ShapeDtypeStruct((b, s, d), jnp.float32),
        in_specs=[pl.BlockSpec(memory_space=vmem)] * 3,
        out_specs=pl.BlockSpec(memory_space=vmem),
        input_output_aliases={0: 0},   # x (operand 0) aliases the output
    )(x, params, embedding)


# ---------------- pure-JAX reference (literal transcription, for verification) ----
def gaussian_position_reference(x, embedding, mu, sigma):
    k = mu.shape[1]
    positions = jnp.tile(
        jnp.arange(TOTAL_SIZE, dtype=jnp.float32)[:, None], (1, k))   # (total, K)
    a = positions - mu
    log_p = -(a * a) / (2.0 * sigma * sigma) - jnp.log(sigma)
    M = jax.nn.softmax(log_p, axis=1)
    pos_enc = M @ embedding                                           # (total, D)
    sel = pos_enc[: x.shape[1] * STRIDE : STRIDE, :]                  # (S, D)
    return x + sel[None, :, :]


def init_params(key):
    # embedding: xavier_uniform_ with gain=1.732 on a (K, d_model) parameter
    bound = 1.732 * jnp.sqrt(6.0 / (K + D_MODEL))
    embedding = jax.random.uniform(key, (K, D_MODEL), jnp.float32, -bound, bound)
    # mu: 0, interval, 2*interval, ...  with interval = total_size / K
    interval = TOTAL_SIZE / K
    mu = (jnp.arange(K, dtype=jnp.float32) * interval)[None, :]       # (1, K)
    sigma = jnp.ones((1, K), jnp.float32)                             # (1, K)
    # Packed parameter buffer (built once at init, not per call): rows = [mu; sigma].
    params = jnp.concatenate([mu, sigma], axis=0)                     # (2, K)
    return embedding, mu, sigma, params


if __name__ == "__main__":
    key = jax.random.PRNGKey(0)
    kx, ke = jax.random.split(key)
    x = jax.random.normal(kx, (B, S, D_MODEL), jnp.float32)
    embedding, mu, sigma, params = init_params(ke)

    # Reference first (x is aliased into the kernel output).
    ref = gaussian_position_reference(x, embedding, mu, sigma)

    out = gaussian_position_forward(x, embedding, params)
    out = jax.block_until_ready(out)

    assert out.shape == (B, S, D_MODEL)
    err = jnp.max(jnp.abs(out - ref))
    assert jnp.allclose(out, ref, atol=2e-3, rtol=2e-3), f"max abs err = {err}"
    print("KERNEL_OK")
</pallas_src>

<mosaic_0001>
module attributes {stable_mosaic.version = 11 : i64} {
  func.func @gaussian_position_kernel(%arg0: memref<2x8x32xf32, #tpu.memory_space<vmem>>, %arg1: memref<2x10xf32, #tpu.memory_space<vmem>>, %arg2: memref<10x32xf32, #tpu.memory_space<vmem>>, %arg3: memref<2x8x32xf32, #tpu.memory_space<vmem>>) attributes {dimension_semantics = [], scalar_prefetch = 0 : i64, scratch_operands = 0 : i64, tpu.core_type = #tpu.core_type<tc>} {
    %c0 = arith.constant 0 : index
    %c0_0 = arith.constant 0 : index
    %0 = vector.load %arg1[%c0, %c0_0] : memref<2x10xf32, #tpu.memory_space<vmem>>, vector<1x10xf32>
    %c1 = arith.constant 1 : index
    %c0_1 = arith.constant 0 : index
    %1 = vector.load %arg1[%c1, %c0_1] : memref<2x10xf32, #tpu.memory_space<vmem>>, vector<1x10xf32>
    %2 = tpu.iota {dimensions = array<i32: 0>} : vector<8x10xi32>
    %3 = arith.sitofp %2 : vector<8x10xi32> to vector<8x10xf32>
    %cst = arith.constant 5.000000e+01 : f32
    %4 = vector.broadcast %cst : f32 to vector<8x10xf32>
    %5 = arith.mulf %3, %4 : vector<8x10xf32>
    %6 = vector.broadcast %0 : vector<1x10xf32> to vector<8x10xf32>
    %7 = arith.subf %5, %6 : vector<8x10xf32>
    %cst_2 = arith.constant 2.000000e+00 : f32
    %8 = vector.broadcast %cst_2 : f32 to vector<1x10xf32>
    %9 = arith.mulf %8, %1 : vector<1x10xf32>
    %10 = arith.mulf %9, %1 : vector<1x10xf32>
    %11 = tpu.reciprocal %10 : vector<1x10xf32> -> vector<1x10xf32>
    %12 = arith.mulf %7, %7 : vector<8x10xf32>
    %cst_3 = arith.constant 0.000000e+00 : f32
    %13 = vector.broadcast %cst_3 : f32 to vector<8x10xf32>
    %14 = arith.subf %13, %12 : vector<8x10xf32>
    %15 = vector.broadcast %11 : vector<1x10xf32> to vector<8x10xf32>
    %16 = arith.mulf %14, %15 : vector<8x10xf32>
    %17 = math.log %1 : vector<1x10xf32>
    %18 = vector.broadcast %17 : vector<1x10xf32> to vector<8x10xf32>
    %19 = arith.subf %16, %18 : vector<8x10xf32>
    %cst_4 = arith.constant dense<0xFF800000> : vector<8xf32>
    %20 = vector.multi_reduction <maximumf>, %19, %cst_4 [1] : vector<8x10xf32> to vector<8xf32>
    %21 = vector.shape_cast %20 : vector<8xf32> to vector<8x1xf32>
    %22 = vector.broadcast %21 : vector<8x1xf32> to vector<8x10xf32>
    %23 = arith.subf %19, %22 : vector<8x10xf32>
    %24 = math.exp %23 : vector<8x10xf32>
    %cst_5 = arith.constant dense<0.000000e+00> : vector<8xf32>
    %25 = vector.multi_reduction <add>, %24, %cst_5 [1] : vector<8x10xf32> to vector<8xf32>
    %26 = vector.shape_cast %25 : vector<8xf32> to vector<8x1xf32>
    %27 = tpu.reciprocal %26 {approx = true} : vector<8x1xf32> -> vector<8x1xf32>
    %28 = vector.broadcast %27 : vector<8x1xf32> to vector<8x10xf32>
    %29 = arith.mulf %24, %28 : vector<8x10xf32>
    %c0_6 = arith.constant 0 : index
    %c0_7 = arith.constant 0 : index
    %30 = vector.load %arg2[%c0_6, %c0_7] : memref<10x32xf32, #tpu.memory_space<vmem>>, vector<10x32xf32>
    %cst_8 = arith.constant dense<0.000000e+00> : vector<8x32xf32>
    %31 = tpu.matmul %29, %30, %cst_8 {dimension_numbers = #tpu.dot_dimension_numbers<[1], [0], [0], [1], [0, 0, 1, 1], [], []>} : vector<8x10xf32>, vector<10x32xf32>, vector<8x32xf32> -> vector<8x32xf32>
    %c0_9 = arith.constant 0 : index
    %c0_10 = arith.constant 0 : index
    %c0_11 = arith.constant 0 : index
    %32 = vector.load %arg0[%c0_9, %c0_10, %c0_11] : memref<2x8x32xf32, #tpu.memory_space<vmem>>, vector<2x8x32xf32>
    %33 = vector.shape_cast %31 : vector<8x32xf32> to vector<1x8x32xf32>
    %34 = vector.broadcast %33 : vector<1x8x32xf32> to vector<2x8x32xf32>
    %35 = arith.addf %32, %34 : vector<2x8x32xf32>
    %c0_12 = arith.constant 0 : index
    %c0_13 = arith.constant 0 : index
    %c0_14 = arith.constant 0 : index
    %36 = vector.load %arg3[%c0_12, %c0_13, %c0_14] : memref<2x8x32xf32, #tpu.memory_space<vmem>>, vector<2x8x32xf32>
    tpu.vector_store %arg3[%c0_12, %c0_13, %c0_14], %35 {strides = array<i32>} : memref<2x8x32xf32, #tpu.memory_space<vmem>>, vector<2x8x32xf32>,
    return
  }
}

</mosaic_0001>

<llo_original>
// kernel: tpu_custom_call.1
$region0: #{tpu_custom_call.1}
  #allocation0 [shape = 'u32[]', space=smem, size = 0x4, offset = 0x4, fixed_abs, tag = 'smem constant byte address 0x4 - core index']
  #allocation1 [shape = 'u32[144,128]{1,0:T(1,128)}', space=vmem, size = 0x12000, scoped, tag = 'internal scratch']
  %s0 = inlined_call_operand.hbm [shape: f32[2,8,32], index: 0, kind: input, shape index: {}, may-alias: {0,3}]
  %s1 = inlined_call_operand.vmem [shape: f32[2,10], index: 1, kind: input, shape index: {}]
  %s2 = inlined_call_operand.vmem [shape: f32[10,32], index: 2, kind: input, shape index: {}]
  %s3 = inlined_call_operand.hbm [shape: f32[2,8,32], index: 3, kind: output, shape index: {}, may-alias: {0,3}]
  %s4 = sld [smem:[#allocation0]]
  $region26: #{tpu_custom_call.1} parent=0
    _
  %s6 = ssub.s32 1, %s4
  %s7 = scalar_select 0, %s6, %s4
  $region1: #{tpu_custom_call.1} parent=0
    #allocation2 [shape = 'u8[8192]{0}', space=vmem, size = 0x2000, scoped, tag = 'input window, operand 0, single buffered']
    #allocation3 [shape = 's32[1]{0}', space=sflag, size = 0x4, scoped, tag = 'scoped memory for tpu_custom_call.1']
    #allocation4 [shape = 's32[1]{0}', space=sflag, size = 0x4, scoped, tag = 'scoped memory for tpu_custom_call.1']
    #allocation5 [shape = 'u8[8192]{0}', space=vmem, size = 0x2000, scoped, tag = 'output window, operand 0, single buffered']
    %8 = vsyncpa [#allocation3], 0
    %9 = vsyncpa [#allocation4], 0
    // Predicated region
    $region2: #{tpu_custom_call.1} parent=1 // pred_check
      _
    $region3: #{tpu_custom_call.1} parent=1 // pred_check_branch
      %11 = sbr.rel (0) target = $region5
    $region4: #{tpu_custom_call.1} parent=1 // pred_region
      %s13 = ssub.s32 256, 256
      %14 = vsyncadd [#allocation3], %s13
      %s15 = sshll.u32 [#allocation2], 4
      %s16 = int_to_ptr.vmem [resolvable:$true] %s15
      %21 = dma.hbm_to_vmem [thread:$0]  %s0, 256, %s16, [#allocation3], 128, 128, 8
    $region5: #{tpu_custom_call.1} parent=1 // pred_fallthru
      _
    // Predicated region
    $region6: #{tpu_custom_call.1} parent=1 // pred_check
      _
    $region7: #{tpu_custom_call.1} parent=1 // pred_check_branch
      %23 = sbr.rel (0) target = $region9
    $region8: #{tpu_custom_call.1} parent=1 // pred_region
      _
    $region9: #{tpu_custom_call.1} parent=1 // pred_fallthru
      _
    // Predicated region
    $region10: #{tpu_custom_call.1} parent=1 // pred_check
      _
    $region11: #{tpu_custom_call.1} parent=1 // pred_check_branch
      %25 = sbr.rel (0) target = $region13
    $region12: #{tpu_custom_call.1} parent=1 // pred_region
      _
    $region13: #{tpu_custom_call.1} parent=1 // pred_fallthru
      _
    // Predicated region
    $region14: #{tpu_custom_call.1} parent=1 // pred_check
      _
    $region15: #{tpu_custom_call.1} parent=1 // pred_check_branch
      %27 = sbr.rel (0) target = $region17
    $region16: #{tpu_custom_call.1} parent=1 // pred_region
      %28 = dma.done [#allocation3], 256
    $region17: #{tpu_custom_call.1} parent=1 // pred_fallthru
      _
    %v29 = vld [vmem:[%s1] sm:$0x1]
    %v30 = vld [vmem:[%s1 + $0x1] sm:$0x1]
    %v31 = vlaneseq
    %v32 = vshrl.u32 %v31, 7
    %v33 = vcvt.s32.f32 %v32
    %v34 = vmul.f32 %v33, 50.0
    %v35 = vlaneseq
    %v36 = vshrl.u32 %v35, 7
    %v37 = vsub.s32 0, %v36
    %v38 = vrot.slane %v29, %v37
    %v39 = vsub.f32 %v34, %v38
    %v40 = vmul.f32 %v30, 2.0
    %v41 = vmul.f32 %v40, %v30
    %v42 = vrcp.pop %v41
    %v43 = vmul.f32 %v39, %v39
    %v44 = vsub.f32 0.0, %v43
    %v45 = vlaneseq
    %v46 = vshrl.u32 %v45, 7
    %v47 = vsub.s32 0, %v46
    %v48 = vrot.slane %v42, %v47
    %v49 = vmul.f32 %v44, %v48
    %v50 = vlog2.pop %v30
    %v51 = vmul.f32 %v50, 0.6931472
    %v52 = vlaneseq
    %v53 = vshrl.u32 %v52, 7
    %v54 = vsub.s32 0, %v53
    %v55 = vrot.slane %v51, %v54
    %v56 = vsub.f32 %v49, %v55
    %vm57 = vcmask 80896
    %v58 = vsel %vm57, %v56, -inf
    %59 = vmax.xlane.f32.xlu0 %v58
    %v60 = vpop.xlane.xlu0 %59
    %v61 = vsub.f32 %v56, %v60
    %v62 = vmul.f32 %v61, 1.442695
    %v63 = vpow.pop %v62
    %v64 = vsel %vm57, %v63, 0.0
    %65 = vadd.xlane.f32.xlu0 %v64
    %v66 = vpop.xlane.xlu0 %65
    %v67 = vrcp.pop %v66
    %v68 = vmul.f32 %v63, %v67
    %v69 = vld [vmem:[%s2] sm:$0xff]
    %v70 = vld [vmem:[%s2 + $0x8] sm:$0x3]
    %v72 = vsel %vm57, %v68, 0
    %vm74 = vcmask 1041408
    %v76 = vsel %vm74, %v70, 0
    %78 = vmatprep.subr.mxu0 0.0
    %79 = vmatpush1.msra.mxu0 %v69
    %80 = vmatprep.subr.mxu0 0.0
    %81 = vmatpush1.msra.mxu0 %v76
    %82 = vmatprep.subr.mxu0 0.0
    %83 = vmatpush1.msra.mxu0 0.0
    %84 = vmatprep.subr.mxu0 0.0
    %85 = vmatpush1.msra.mxu0 0.0
    %86 = vmatprep.subr.mxu0 0.0
    %87 = vmatpush1.msra.mxu0 0.0
    %88 = vmatprep.subr.mxu0 0.0
    %89 = vmatpush1.msra.mxu0 0.0
    %90 = vmatprep.subr.mxu0 0.0
    %91 = vmatpush1.msra.mxu0 0.0
    %92 = vmatprep.subr.mxu0 0.0
    %93 = vmatpush1.msra.mxu0 0.0
    %94 = vmatprep.subr.mxu0 0.0
    %95 = vmatpush1.msra.mxu0 0.0
    %96 = vmatprep.subr.mxu0 0.0
    %97 = vmatpush1.msra.mxu0 0.0
    %98 = vmatprep.subr.mxu0 0.0
    %99 = vmatpush1.msra.mxu0 0.0
    %100 = vmatprep.subr.mxu0 0.0
    %101 = vmatpush1.msra.mxu0 0.0
    %102 = vmatprep.subr.mxu0 0.0
    %103 = vmatpush1.msra.mxu0 0.0
    %104 = vmatprep.subr.mxu0 0.0
    %105 = vmatpush1.msra.mxu0 0.0
    %106 = vmatprep.subr.mxu0 0.0
    %107 = vmatpush1.msra.mxu0 0.0
    %108 = vmatprep.subr.mxu0 0.0
    %109 = vmatpush1.msra.mxu0 0.0
    %110 = vmatprep.subr.mxu0 0.0
    %111 = vmatpush1.msra.mxu0 0.0
    %112 = vmatprep.subr.mxu0 0.0
    %113 = vmatpush1.msra.mxu0 0.0
    %114 = vmatprep.subr.mxu0 0.0
    %115 = vmatpush1.msra.mxu0 0.0
    %116 = vmatprep.subr.mxu0 0.0
    %117 = vmatpush1.msra.mxu0 0.0
    %118 = vmatprep.subr.mxu0 0.0
    %119 = vmatpush1.msra.mxu0 0.0
    %120 = vmatprep.subr.mxu0 0.0
    %121 = vmatpush1.msra.mxu0 0.0
    %122 = vmatprep.subr.mxu0 0.0
    %123 = vmatpush1.msra.mxu0 0.0
    %124 = vmatprep.subr.mxu0 0.0
    %125 = vmatpush1.msra.mxu0 0.0
    %126 = vmatprep.subr.mxu0 0.0
    %127 = vmatpush1.msra.mxu0 0.0
    %128 = vmatprep.subr.mxu0 0.0
    %129 = vmatpush1.msra.mxu0 0.0
    %130 = vmatprep.subr.mxu0 0.0
    %131 = vmatpush1.msra.mxu0 0.0
    %132 = vmatprep.subr.mxu0 0.0
    %133 = vmatpush1.msra.mxu0 0.0
    %134 = vmatprep.subr.mxu0 0.0
    %135 = vmatpush1.msra.mxu0 0.0
    %136 = vmatprep.subr.mxu0 0.0
    %137 = vmatpush1.msra.mxu0 0.0
    %138 = vmatprep.subr.mxu0 0.0
    %139 = vmatpush1.msra.mxu0 0.0
    %140 = vmatprep.subr.mxu0 0.0
    %141 = vmatpush1.msra.mxu0 0.0
    %142 = vmatprep.mubr.f32.mxu0 0.0
    %143 = vmatmul.mubr.f32.gmra.mrb[0].mxu0 %v72
    %v144 = vpop.f32.mrb[0].mxu0
    %v145 = vadd.f32 0.0, %v144
    %v146 = vpop.f32.mrb[0].mxu0
    %147 = vdwg.mxu0
    %v148 = vld [vmem:[#allocation2] sm:$0xff]
    %v149 = vld [vmem:[#allocation2 + $0x8] sm:$0xff]
    %v150 = vadd.f32 %v148, %v145
    %v151 = vadd.f32 %v149, %v145
    %vm152 = vcmask 261120
    %153 = vst.msk [vmem:[#allocation5] sm:$0xff] %vm152, %v150
    %154 = vst.msk [vmem:[#allocation5 + $0x8] sm:$0xff] %vm152, %v151
    // Predicated region
    $region18: #{tpu_custom_call.1} parent=1 // pred_check
      _
    $region19: #{tpu_custom_call.1} parent=1 // pred_check_branch
      %156 = sbr.rel (0) target = $region21
    $region20: #{tpu_custom_call.1} parent=1 // pred_region
      %s158 = ssub.s32 256, 256
      %159 = vsyncadd [#allocation4], %s158
      %s160 = sshll.u32 [#allocation5], 4
      %s161 = int_to_ptr.vmem [resolvable:$true] %s160
      %166 = dma.vmem_to_hbm [thread:$0]  %s161, 256, %s3, [#allocation4], 128, 128, 8
    $region21: #{tpu_custom_call.1} parent=1 // pred_fallthru
      _
    // Predicated region
    $region22: #{tpu_custom_call.1} parent=1 // pred_check
      _
    $region23: #{tpu_custom_call.1} parent=1 // pred_check_branch
      %168 = sbr.rel (0) target = $region25
    $region24: #{tpu_custom_call.1} parent=1 // pred_region
      %169 = dma.done [#allocation4], 256
    $region25: #{tpu_custom_call.1} parent=1 // pred_fallthru
      _
    %170 = vsyncpa [#allocation3], 1
    %171 = vsyncpa [#allocation4], 1

</llo_original>
